<compile_context>
chip_gen: v7x
topology: tpu7x:2x2x1
jax: 0.10.0
libtpu: 0.0.40
codegen_flags: <defaults>
</compile_context>

<pallas_src>
import functools

import jax
import jax.numpy as jnp
from jax.experimental import pallas as pl
from jax.experimental.pallas import tpu as pltpu


def _rmsnorm_kernel(x_ref, w_ref, o_ref, *, eps):
    # Upcast to f32 exactly like the PyTorch module.
    x = x_ref[...].astype(jnp.float32)
    # variance = mean(x^2, axis=-1, keepdims=True)  (lane reduction on the XLU)
    var = jnp.mean(x * x, axis=-1, keepdims=True)
    inv = jax.lax.rsqrt(var + eps)  # EUP slot, free relative to the VPU stream
    # Cast the normalized activations back to the *input* dtype first
    # (matches `hidden_states.to(input_dtype)`), then multiply by weight.
    hs = (x * inv).astype(x_ref.dtype)
    o_ref[...] = (w_ref[...] * hs).astype(o_ref.dtype)


@functools.lru_cache(maxsize=None)
def _vmem_budgets():
    """Per-generation (working_set_budget, vmem_limit_bytes, max_block_rows).

    v5e / v6e have 128 MiB VMEM per TensorCore; v7x has 64 MiB physical, so
    keep its scoped limit <= ~48 MiB to leave room for Mosaic's internal
    scratch and the f32 temporaries in the kernel body.
    """
    try:
        cap = pltpu.get_tpu_info().vmem_capacity_bytes
    except Exception:
        cap = 64 * 1024 * 1024  # conservative fallback (assume v7x-sized VMEM)
    if cap >= 96 * 1024 * 1024:
        # v5e / v6e (128 MiB VMEM): spend it — halves the number of grid steps.
        return 56 * 1024 * 1024, 96 * 1024 * 1024, 2048
    # v7x (64 MiB VMEM, ~3.2 TB/s HBM): keep blocks >= ~4 MiB so the fixed
    # ~0.35 us/step pipeline overhead stays small relative to per-block DMA.
    return 28 * 1024 * 1024, 48 * 1024 * 1024, 1024


def _pick_block_rows(hidden, x_bytes, out_bytes):
    """Largest multiple-of-8 row tile whose pipelined working set fits VMEM."""
    working_budget, _, max_rows = _vmem_budgets()
    # Per-row VMEM footprint: 2x double-buffered input + 2x double-buffered
    # output + ~one f32 temporary (Mosaic streams the upcast/x*x/scale chain
    # through vregs rather than materializing multiple full f32 tiles).
    per_row = hidden * (2 * x_bytes + 2 * out_bytes + 4)
    budget_rows = max(8, working_budget // per_row)
    tr = min(max_rows, (budget_rows // 8) * 8)
    return max(8, tr)


def phi3_rmsnorm(hidden_states, weight, eps=1e-6, block_rows=None):
    """RMSNorm over the last axis, computed in float32.

    hidden_states: (..., hidden);  weight: (hidden,)
    Output dtype = result_type(weight, hidden_states) — identical promotion to
    `self.weight * hidden_states.to(input_dtype)` in the PyTorch module.

    Note: for production shapes `hidden` should be a multiple of 128
    (Phi-3: 3072) so the output stores stay lane-dense; a narrow last dim
    degenerates to masked partial stores.
    # TODO(synk): if a model ever ships hidden % 128 != 0 / hidden < 128, fold
    # rows into the lane axis instead of accepting masked narrow stores.
    """
    orig_shape = hidden_states.shape
    hidden = orig_shape[-1]
    x2d = hidden_states.reshape(-1, hidden)
    rows = x2d.shape[0]
    w2d = weight.reshape(1, hidden)
    out_dtype = jnp.result_type(weight.dtype, hidden_states.dtype)

    x_bytes = jnp.dtype(hidden_states.dtype).itemsize
    w_bytes = jnp.dtype(weight.dtype).itemsize
    o_bytes = jnp.dtype(out_dtype).itemsize

    if block_rows is None:
        block_rows = _pick_block_rows(hidden, x_bytes, o_bytes)
    elif block_rows < rows and block_rows % 8 != 0:
        # Row tiles must be a multiple of 8 (sublane) unless they span the
        # whole row axis.
        block_rows = max(8, block_rows - block_rows % 8)

    # Single block if everything fits; otherwise a ragged last block via
    # pl.cdiv — Pallas pads OOB reads and drops OOB writes, and the per-row
    # lane reduction is unaffected by garbage tail rows.  No jnp.pad copy.
    tr = rows if rows <= block_rows else block_rows
    grid = (pl.cdiv(rows, tr),)

    _, vmem_limit, _ = _vmem_budgets()

    # Advisory cost estimate so XLA schedules neighbors of this bandwidth-bound
    # custom call correctly (it otherwise assumes a cheap op).
    cost = pl.CostEstimate(
        flops=int(5 * rows * hidden),
        transcendentals=int(rows),
        bytes_accessed=int(rows * hidden * (x_bytes + o_bytes) + hidden * w_bytes),
    )

    out = pl.pallas_call(
        functools.partial(_rmsnorm_kernel, eps=eps),
        out_shape=jax.ShapeDtypeStruct((rows, hidden), out_dtype),
        grid_spec=pltpu.PrefetchScalarGridSpec(
            num_scalar_prefetch=0,
            grid=grid,
            in_specs=[
                pl.BlockSpec((tr, hidden), lambda i: (i, 0)),
                # Constant-index weight block: Pallas skips the re-DMA because
                # the block index never changes; do NOT broadcast in the wrapper.
                pl.BlockSpec((1, hidden), lambda i: (0, 0)),
            ],
            out_specs=pl.BlockSpec((tr, hidden), lambda i: (i, 0)),
        ),
        compiler_params=pltpu.CompilerParams(
            # TODO(synk): on v7x, verify in a trace whether the row axis needs
            # pltpu.CORE_PARALLEL (or an explicit core split) to keep both
            # TensorCores busy; "parallel" is a no-op on single-TC v5e/v6e.
            dimension_semantics=("parallel",),
            vmem_limit_bytes=vmem_limit,
        ),
        cost_estimate=cost,
    )(x2d, w2d)

    return out.reshape(orig_shape[:-1] + (hidden,))


def _reference_rmsnorm(hidden_states, weight, eps=1e-6):
    input_dtype = hidden_states.dtype
    hs = hidden_states.astype(jnp.float32)
    var = jnp.mean(hs * hs, axis=-1, keepdims=True)
    hs = hs * jax.lax.rsqrt(var + eps)
    return weight * hs.astype(input_dtype)


if __name__ == "__main__":
    eps = 1e-6

    # Small smoke test at the module's natural layout: (batch, seq, hidden).
    batch, seq, hidden = 2, 8, 32
    key = jax.random.PRNGKey(0)
    x = jax.random.normal(key, (batch, seq, hidden), dtype=jnp.float32)
    # nn.Parameter(torch.ones(hidden_size)) — deterministic init of ones.
    weight = jnp.ones((hidden,), dtype=jnp.float32)

    out = jax.block_until_ready(phi3_rmsnorm(x, weight, eps=eps))
    ref = _reference_rmsnorm(x, weight, eps=eps)
    assert out.shape == ref.shape and out.dtype == ref.dtype
    assert jnp.allclose(out, ref, atol=1e-5, rtol=1e-5)

    # Exercise the ragged-last-block path (rows=15 with 8-row tiles -> grid of
    # 2, last block partially OOB) and mixed dtype promotion
    # (bf16 activations, f32 weight -> f32 output).
    x2 = jax.random.normal(jax.random.PRNGKey(1), (3, 5, 128), dtype=jnp.bfloat16)
    w2 = jax.random.normal(jax.random.PRNGKey(2), (128,), dtype=jnp.float32)
    out2 = jax.block_until_ready(phi3_rmsnorm(x2, w2, eps=eps, block_rows=8))
    ref2 = _reference_rmsnorm(x2, w2, eps=eps)
    assert out2.shape == ref2.shape and out2.dtype == ref2.dtype
    assert jnp.allclose(out2, ref2, atol=2e-2, rtol=2e-2)

    # Same-dtype bf16 path (bf16 weight -> bf16 output), non-ragged multi-block.
    x3 = jax.random.normal(jax.random.PRNGKey(3), (4, 8, 128), dtype=jnp.bfloat16)
    w3 = jnp.ones((128,), dtype=jnp.bfloat16)
    out3 = jax.block_until_ready(phi3_rmsnorm(x3, w3, eps=eps, block_rows=16))
    ref3 = _reference_rmsnorm(x3, w3, eps=eps)
    assert out3.shape == ref3.shape and out3.dtype == ref3.dtype
    assert jnp.allclose(out3.astype(jnp.float32), ref3.astype(jnp.float32),
                        atol=2e-2, rtol=2e-2)

    print("KERNEL_OK")
</pallas_src>

<mosaic_0001>
module attributes {stable_mosaic.version = 11 : i64} {
  func.func @_rmsnorm_kernel(%arg0: i32, %arg1: memref<16x32xf32, #tpu.memory_space<vmem>>, %arg2: memref<1x32xf32, #tpu.memory_space<vmem>>, %arg3: memref<16x32xf32, #tpu.memory_space<vmem>>) attributes {dimension_semantics = [#tpu.dimension_semantics<parallel>], iteration_bounds = array<i64: 1>, scalar_prefetch = 0 : i64, scratch_operands = 0 : i64, tpu.core_type = #tpu.core_type<tc>, window_params = [{transform_indices = @transform_0, window_bounds = array<i64: 16, 32>}, {pipeline_mode = #tpu.pipeline_mode<synchronous>, transform_indices = @transform_1, window_bounds = array<i64: 1, 32>}, {transform_indices = @transform_2, window_bounds = array<i64: 16, 32>}]} {
    %c0 = arith.constant 0 : index
    %c0_0 = arith.constant 0 : index
    %0 = vector.load %arg1[%c0, %c0_0] : memref<16x32xf32, #tpu.memory_space<vmem>>, vector<16x32xf32>
    %1 = arith.mulf %0, %0 : vector<16x32xf32>
    %cst = arith.constant dense<0.000000e+00> : vector<16xf32>
    %2 = vector.multi_reduction <add>, %1, %cst [1] : vector<16x32xf32> to vector<16xf32>
    %3 = vector.shape_cast %2 : vector<16xf32> to vector<16x1xf32>
    %cst_1 = arith.constant 3.200000e+01 : f32
    %4 = vector.broadcast %cst_1 : f32 to vector<16x1xf32>
    %5 = arith.divf %3, %4 : vector<16x1xf32>
    %cst_2 = arith.constant 9.99999997E-7 : f32
    %6 = vector.broadcast %cst_2 : f32 to vector<16x1xf32>
    %7 = arith.addf %5, %6 : vector<16x1xf32>
    %8 = math.rsqrt %7 : vector<16x1xf32>
    %9 = vector.broadcast %8 : vector<16x1xf32> to vector<16x32xf32>
    %10 = arith.mulf %0, %9 : vector<16x32xf32>
    %c0_3 = arith.constant 0 : index
    %c0_4 = arith.constant 0 : index
    %11 = vector.load %arg2[%c0_3, %c0_4] : memref<1x32xf32, #tpu.memory_space<vmem>>, vector<1x32xf32>
    %12 = vector.broadcast %11 : vector<1x32xf32> to vector<16x32xf32>
    %13 = arith.mulf %12, %10 : vector<16x32xf32>
    %c0_5 = arith.constant 0 : index
    %c0_6 = arith.constant 0 : index
    %14 = vector.load %arg3[%c0_5, %c0_6] : memref<16x32xf32, #tpu.memory_space<vmem>>, vector<16x32xf32>
    tpu.vector_store %arg3[%c0_5, %c0_6], %13 {strides = array<i32>} : memref<16x32xf32, #tpu.memory_space<vmem>>, vector<16x32xf32>,
    return
  }
  func.func @transform_0(%arg0: i32) -> (i32, i32) {
    %c0_i32 = arith.constant 0 : i32
    %c0_i32_0 = arith.constant 0 : i32
    return %arg0, %c0_i32 : i32, i32
  }
  func.func @transform_1(%arg0: i32) -> (i32, i32) {
    %c0_i32 = arith.constant 0 : i32
    %c0_i32_0 = arith.constant 0 : i32
    %c0_i32_1 = arith.constant 0 : i32
    return %c0_i32, %c0_i32_0 : i32, i32
  }
  func.func @transform_2(%arg0: i32) -> (i32, i32) {
    %c0_i32 = arith.constant 0 : i32
    %c0_i32_0 = arith.constant 0 : i32
    return %arg0, %c0_i32 : i32, i32
  }
}

</mosaic_0001>

<llo_original>
// kernel: tpu_custom_call.1
$region0: #{tpu_custom_call.1}
  #allocation0 [shape = 'u32[]', space=smem, size = 0x4, offset = 0x4, fixed_abs, tag = 'smem constant byte address 0x4 - core index']
  #allocation1 [shape = 'u32[144,128]{1,0:T(1,128)}', space=vmem, size = 0x12000, scoped, tag = 'internal scratch']
  %s0 = inlined_call_operand.hbm [shape: f32[16,32], index: 0, kind: input, shape index: {}]
  %s1 = inlined_call_operand.vmem [shape: f32[1,32], index: 1, kind: input, shape index: {}]
  %s2 = inlined_call_operand.hbm [shape: f32[16,32], index: 2, kind: output, shape index: {}]
  %s3 = sld [smem:[#allocation0]]
  $region22: #{tpu_custom_call.1} parent=0
    _
  %s5 = ssub.s32 1, %s3
  %s6 = scalar_select 0, %s5, %s3
  $region1: #{tpu_custom_call.1} parent=0
    #allocation2 [shape = 'u8[8192]{0}', space=vmem, size = 0x2000, scoped, tag = 'input window, operand 0, single buffered']
    #allocation3 [shape = 's32[1]{0}', space=sflag, size = 0x4, scoped, tag = 'scoped memory for tpu_custom_call.1']
    #allocation4 [shape = 's32[1]{0}', space=sflag, size = 0x4, scoped, tag = 'scoped memory for tpu_custom_call.1']
    #allocation5 [shape = 'u8[8192]{0}', space=vmem, size = 0x2000, scoped, tag = 'output window, operand 0, single buffered']
    %7 = vsyncpa [#allocation3], 0
    %8 = vsyncpa [#allocation4], 0
    // Predicated region
    $region2: #{tpu_custom_call.1} parent=1 // pred_check
      _
    $region3: #{tpu_custom_call.1} parent=1 // pred_check_branch
      %10 = sbr.rel (0) target = $region5
    $region4: #{tpu_custom_call.1} parent=1 // pred_region
      %s12 = ssub.s32 256, 256
      %13 = vsyncadd [#allocation3], %s12
      %s14 = sshll.u32 [#allocation2], 4
      %s15 = int_to_ptr.vmem [resolvable:$true] %s14
      %20 = dma.hbm_to_vmem [thread:$0]  %s0, 256, %s15, [#allocation3], 128, 128, 8
    $region5: #{tpu_custom_call.1} parent=1 // pred_fallthru
      _
    // Predicated region
    $region6: #{tpu_custom_call.1} parent=1 // pred_check
      _
    $region7: #{tpu_custom_call.1} parent=1 // pred_check_branch
      %22 = sbr.rel (0) target = $region9
    $region8: #{tpu_custom_call.1} parent=1 // pred_region
      _
    $region9: #{tpu_custom_call.1} parent=1 // pred_fallthru
      _
    // Predicated region
    $region10: #{tpu_custom_call.1} parent=1 // pred_check
      _
    $region11: #{tpu_custom_call.1} parent=1 // pred_check_branch
      %24 = sbr.rel (0) target = $region13
    $region12: #{tpu_custom_call.1} parent=1 // pred_region
      %25 = dma.done [#allocation3], 256
    $region13: #{tpu_custom_call.1} parent=1 // pred_fallthru
      _
    %v26 = vld [vmem:[#allocation2] sm:$0xff]
    %v27 = vld [vmem:[#allocation2 + $0x8] sm:$0xff]
    %v28 = vmul.f32 %v26, %v26
    %v29 = vmul.f32 %v27, %v27
    %vm30 = vcmask 261120
    %v31 = vsel %vm30, %v28, 0.0
    %32 = vadd.xlane.f32.xlu0 %v31
    %v33 = vpop.xlane.xlu0 %32
    %v34 = vsel %vm30, %v29, 0.0
    %35 = vadd.xlane.f32.xlu0 %v34
    %v36 = vpop.xlane.xlu0 %35
    %v37 = vrcp.pop 32.0
    %v38 = vmul.f32 %v33, %v37
    %v39 = vmul.f32 %v36, %v37
    %v40 = vadd.f32 %v38, 1e-06
    %v41 = vadd.f32 %v39, 1e-06
    %v42 = vrsqrt.pop %v40
    %v43 = vrsqrt.pop %v41
    %v44 = vmul.f32 %v26, %v42
    %v45 = vmul.f32 %v27, %v43
    %v46 = vld [vmem:[%s1] sm:$0x1]
    %v48 = vlaneseq
    %v49 = vshrl.u32 %v48, 7
    %v50 = vsub.s32 0, %v49
    %v51 = vrot.slane %v46, %v50
    %v53 = vmul.f32 %v51, %v44
    %v54 = vmul.f32 %v51, %v45
    %55 = vst.msk [vmem:[#allocation5] sm:$0xff] %vm30, %v53
    %56 = vst.msk [vmem:[#allocation5 + $0x8] sm:$0xff] %vm30, %v54
    // Predicated region
    $region14: #{tpu_custom_call.1} parent=1 // pred_check
      _
    $region15: #{tpu_custom_call.1} parent=1 // pred_check_branch
      %58 = sbr.rel (0) target = $region17
    $region16: #{tpu_custom_call.1} parent=1 // pred_region
      %s60 = ssub.s32 256, 256
      %61 = vsyncadd [#allocation4], %s60
      %s62 = sshll.u32 [#allocation5], 4
      %s63 = int_to_ptr.vmem [resolvable:$true] %s62
      %68 = dma.vmem_to_hbm [thread:$0]  %s63, 256, %s2, [#allocation4], 128, 128, 8
    $region17: #{tpu_custom_call.1} parent=1 // pred_fallthru
      _
    // Predicated region
    $region18: #{tpu_custom_call.1} parent=1 // pred_check
      _
    $region19: #{tpu_custom_call.1} parent=1 // pred_check_branch
      %70 = sbr.rel (0) target = $region21
    $region20: #{tpu_custom_call.1} parent=1 // pred_region
      %71 = dma.done [#allocation4], 256
    $region21: #{tpu_custom_call.1} parent=1 // pred_fallthru
      _
    %72 = vsyncpa [#allocation3], 1
    %73 = vsyncpa [#allocation4], 1

</llo_original>
